<compile_context>
chip_gen: v6e
topology: v6e:2x2x1
jax: 0.10.0
libtpu: 0.0.40
codegen_flags: <defaults>
</compile_context>

<pallas_src>
import functools
import math

import jax
import jax.numpy as jnp
from jax.experimental import pallas as pl
from jax.experimental.pallas import tpu as pltpu


# ------------------------------ pos table ----------------------------------

def _build_pos_table(dim: int, max_length: int) -> jnp.ndarray:
    """Deterministic sinusoidal table, identical math to the PyTorch __init__."""
    assert dim % 2 == 0
    d = jnp.exp(jnp.arange(0.0, dim, 2.0, dtype=jnp.float32)
                * (-math.log(10000.0) / dim))                           # (dim/2,)
    position = jnp.arange(0.0, max_length, dtype=jnp.float32)[:, None]  # (L, 1)
    angles = position * d                                               # (L, dim/2)
    sin = jnp.sin(angles)
    cos = jnp.cos(angles)
    # interleave: even feature indices <- sin, odd <- cos
    pos = jnp.stack([sin, cos], axis=-1).reshape(max_length, dim)
    return pos[None, :, :]                                              # (1, L, dim)


# ------------------------------ kernel --------------------------------------

def _add_pos_kernel(x_ref, pos_ref, o_ref):
    # Pure HBM/DMA-bound broadcast add; the VPU work is trivially hidden.
    o_ref[...] = x_ref[...] + pos_ref[...]


# --------------------------- sizing helpers ---------------------------------

_SMALL_LIMIT_BYTES = 256 * 1024          # below this, a fused XLA add wins
_VMEM_LIMIT_BYTES = 32 * 1024 * 1024     # safe on every generation (v7x: 64 MiB phys)


@functools.lru_cache(maxsize=1)
def _target_block_bytes() -> int:
    """Generation-aware block-size target for this DMA-bound kernel."""
    try:
        info = pltpu.get_tpu_info()
        vmem = getattr(info, "vmem_capacity_bytes", None)
        if vmem is not None and vmem <= 64 * 1024 * 1024:
            # v7x: 64 MiB VMEM per TC, ~3.2 TB/s HBM -> bigger blocks so the
            # ~0.35 us per-grid-step cost stays small vs. the transfer time.
            # Footprint: 3 operands x 2 buffers x 4 MiB = 24 MiB < 32 MiB cap.
            return 4 * 1024 * 1024
    except Exception:
        pass
    # v5e (~0.8 TB/s) / v6e (~1.4 TB/s): ~2 MiB blocks already sit near roofline.
    return 2 * 1024 * 1024


# --------------------------- public function --------------------------------

def position_encode_1d(x: jnp.ndarray, pos: jnp.ndarray) -> jnp.ndarray:
    """x: (B, T, D); pos: (1, max_length, D) table (cached in x's dtype ideally)."""
    B, T, D = x.shape
    assert pos.ndim == 3 and pos.shape[0] == 1, "pos must be (1, max_length, D)"
    assert pos.shape[2] == D, "feature dim of x does not match the pos table"
    assert T <= pos.shape[1], "sequence longer than max_length"

    dtype = x.dtype
    if pos.dtype != dtype:           # only hit if the caller mixes dtypes
        pos = pos.astype(dtype)
    itemsize = jnp.dtype(dtype).itemsize

    # Escape hatch: for tiny inputs the pallas_call launch + per-step overhead
    # dominates; XLA fuses this broadcast add for free.
    if B * T * D * itemsize < _SMALL_LIMIT_BYTES:
        return x + pos[:, :T, :]

    # Sublane packing unit: 8 rows for f32, 16 for bf16, 32 for int8/fp8.
    pack = 8 * max(1, 4 // itemsize)
    target = _target_block_bytes()
    row_bytes = D * itemsize

    if T >= pack:
        # Row-tile the sequence axis; tile_t is a multiple of the sublane pack
        # (always a legal block shape), sized to hit the per-chip byte target.
        max_rows = (T // pack) * pack
        want_rows = max(pack, (target // row_bytes) // pack * pack)
        tile_t = min(max_rows, want_rows)
        pos_in = pos                      # full cached table; no per-call slice
    else:
        # Degenerate tiny-T case (rarely reached past the escape hatch):
        # full-T block needs the "equals full array dim" exception, so the pos
        # operand must be sliced to exactly T rows as well.
        tile_t = T
        pos_in = pos[:, :T, :]

    n_t = pl.cdiv(T, tile_t)   # partial last block (if any) is clipped by Pallas

    block = (1, tile_t, D)     # last dim = full D (lane axis), legal for any D
    return pl.pallas_call(
        _add_pos_kernel,
        out_shape=jax.ShapeDtypeStruct((B, T, D), dtype),
        grid_spec=pltpu.PrefetchScalarGridSpec(
            num_scalar_prefetch=0,
            # Batch innermost (fastest-varying): the pos block index is constant
            # across consecutive iterations, so its DMA is elided per row tile.
            grid=(n_t, B),
            in_specs=[
                pl.BlockSpec(block, lambda t, b: (b, t, 0)),   # x
                pl.BlockSpec(block, lambda t, b: (0, t, 0)),   # pos (batch-bcast)
            ],
            out_specs=pl.BlockSpec(block, lambda t, b: (b, t, 0)),
        ),
        compiler_params=pltpu.CompilerParams(
            dimension_semantics=("parallel", "parallel"),
            vmem_limit_bytes=_VMEM_LIMIT_BYTES,
        ),
    )(x, pos_in)
    # TODO(synk): if D ever becomes so large that a single (tile_t, D) row block
    # exceeds VMEM, additionally tile the feature axis in multiples of 128.


# ------------------------------ module wrapper -------------------------------

class PositionEncode1D:
    """Thin wrapper mirroring the PyTorch module interface."""

    def __init__(self, dim: int, max_length: int, dtype=jnp.float32):
        assert dim % 2 == 0
        self.dim = dim
        self.max_length = max_length
        # Built + cast once, already in the (1, max_length, dim) layout the
        # kernel consumes — nothing table-related happens per call.
        self.pos = _build_pos_table(dim, max_length).astype(dtype)

    def __call__(self, x: jnp.ndarray) -> jnp.ndarray:
        B, T, D = x.shape
        assert D == self.dim, f"x feature dim {D} != module dim {self.dim}"
        assert T <= self.max_length, "sequence longer than max_length"
        return position_encode_1d(x, self.pos)


# ------------------------------ demo / check ---------------------------------

if __name__ == "__main__":
    MAX_LENGTH = 300
    key = jax.random.PRNGKey(0)
    k1, k2 = jax.random.split(key)

    # 1) Small shape consistent with the module forward (batch=2, seq=8, dim=32).
    #    This hits the small-input escape hatch (fused XLA add).
    B, T, DIM = 2, 8, 32
    mod_small = PositionEncode1D(DIM, MAX_LENGTH)
    x_small = jax.random.normal(k1, (B, T, DIM), dtype=jnp.float32)
    out_small = jax.block_until_ready(mod_small(x_small))
    ref_small = x_small + mod_small.pos[:, :T, :]
    assert out_small.shape == (B, T, DIM)
    assert jnp.allclose(out_small, ref_small, atol=1e-6), "small-path mismatch"

    # 2) Larger shape that exercises the Pallas kernel path (row-tiled grid,
    #    batch-innermost pos DMA elision).
    B2, T2, DIM2 = 4, 296, 128
    mod_big = PositionEncode1D(DIM2, MAX_LENGTH)
    x_big = jax.random.normal(k2, (B2, T2, DIM2), dtype=jnp.float32)
    out_big = jax.block_until_ready(mod_big(x_big))
    ref_big = x_big + mod_big.pos[:, :T2, :]
    assert out_big.shape == (B2, T2, DIM2)
    assert jnp.allclose(out_big, ref_big, atol=1e-6), "pallas-path mismatch"

    print("KERNEL_OK")
</pallas_src>

<mosaic_0001>
module attributes {stable_mosaic.version = 11 : i64} {
  func.func @_add_pos_kernel(%arg0: i32, %arg1: i32, %arg2: memref<1x296x128xf32, #tpu.memory_space<vmem>>, %arg3: memref<1x296x128xf32, #tpu.memory_space<vmem>>, %arg4: memref<1x296x128xf32, #tpu.memory_space<vmem>>) attributes {dimension_semantics = [#tpu.dimension_semantics<parallel>, #tpu.dimension_semantics<parallel>], iteration_bounds = array<i64: 1, 4>, scalar_prefetch = 0 : i64, scratch_operands = 0 : i64, tpu.core_type = #tpu.core_type<tc>, window_params = [{transform_indices = @transform_0, window_bounds = array<i64: 1, 296, 128>}, {transform_indices = @transform_1, window_bounds = array<i64: 1, 296, 128>}, {transform_indices = @transform_2, window_bounds = array<i64: 1, 296, 128>}]} {
    %c0 = arith.constant 0 : index
    %c0_0 = arith.constant 0 : index
    %c0_1 = arith.constant 0 : index
    %0 = vector.load %arg2[%c0, %c0_0, %c0_1] : memref<1x296x128xf32, #tpu.memory_space<vmem>>, vector<1x296x128xf32>
    %c0_2 = arith.constant 0 : index
    %c0_3 = arith.constant 0 : index
    %c0_4 = arith.constant 0 : index
    %1 = vector.load %arg3[%c0_2, %c0_3, %c0_4] : memref<1x296x128xf32, #tpu.memory_space<vmem>>, vector<1x296x128xf32>
    %2 = arith.addf %0, %1 : vector<1x296x128xf32>
    %c0_5 = arith.constant 0 : index
    %c0_6 = arith.constant 0 : index
    %c0_7 = arith.constant 0 : index
    %3 = vector.load %arg4[%c0_5, %c0_6, %c0_7] : memref<1x296x128xf32, #tpu.memory_space<vmem>>, vector<1x296x128xf32>
    tpu.vector_store %arg4[%c0_5, %c0_6, %c0_7], %2 {strides = array<i32>} : memref<1x296x128xf32, #tpu.memory_space<vmem>>, vector<1x296x128xf32>,
    return
  }
  func.func @transform_0(%arg0: i32, %arg1: i32) -> (i32, i32, i32) {
    %c0_i32 = arith.constant 0 : i32
    %c0_i32_0 = arith.constant 0 : i32
    return %arg1, %arg0, %c0_i32 : i32, i32, i32
  }
  func.func @transform_1(%arg0: i32, %arg1: i32) -> (i32, i32, i32) {
    %c0_i32 = arith.constant 0 : i32
    %c0_i32_0 = arith.constant 0 : i32
    %c0_i32_1 = arith.constant 0 : i32
    return %c0_i32, %arg0, %c0_i32_0 : i32, i32, i32
  }
  func.func @transform_2(%arg0: i32, %arg1: i32) -> (i32, i32, i32) {
    %c0_i32 = arith.constant 0 : i32
    %c0_i32_0 = arith.constant 0 : i32
    return %arg1, %arg0, %c0_i32 : i32, i32, i32
  }
}

</mosaic_0001>

<llo_original>
// kernel: tpu_custom_call.1
$region0: #{tpu_custom_call.1}
  #allocation0 [shape = 'u32[]', space=smem, size = 0x4, offset = 0x4, fixed_abs, tag = 'smem constant byte address 0x4 - core index']
  #allocation1 [shape = 'u32[144,128]{1,0:T(1,128)}', space=vmem, size = 0x12000, scoped, tag = 'internal scratch']
  %s0 = inlined_call_operand.hbm [shape: f32[4,296,128], index: 0, kind: input, shape index: {}]
  %s1 = inlined_call_operand.vmem [shape: f32[1,300,128], index: 1, kind: input, shape index: {}]
  %s2 = inlined_call_operand.hbm [shape: f32[4,296,128], index: 2, kind: output, shape index: {}]
  %s3 = sld [smem:[#allocation0]]
  $region45: #{tpu_custom_call.1} parent=0
    _
  %s5 = ssub.s32 1, %s3
  %s6 = scalar_select 0, %s5, %s3
  $region1: #{tpu_custom_call.1} parent=0
    #allocation2 [shape = 'u8[303104]{0}', space=vmem, size = 0x4a000, scoped, tag = 'input window, operand 0']
    #allocation3 [shape = 's32[2]{0}', space=sflag, size = 0x8, scoped, tag = 'scoped memory for tpu_custom_call.1']
    #allocation4 [shape = 's32[2]{0}', space=sflag, size = 0x8, scoped, tag = 'scoped memory for tpu_custom_call.1']
    #allocation5 [shape = 'u8[303104]{0}', space=vmem, size = 0x4a000, scoped, tag = 'output window, operand 0']
    %7 = vsyncpa [#allocation3], 0
    %s8 = scalar_lea.sflag [#allocation3], 1
    %9 = vsyncpa %s8, 0
    %10 = vsyncpa [#allocation4], 0
    %s11 = scalar_lea.sflag [#allocation4], 1
    %12 = vsyncpa %s11, 0
    loop: start=0, step=1, limit=6
    $region2: #{tpu_custom_call.1} parent=1 // loop_pre_header
      _
    $region3: #{tpu_custom_call.1} parent=1 // loop_header
      %s14 = sphi 0, %s18
      %p15 = scmp.ge.s32.totalorder %s14, 6
      %s21 = sphi 0, %s33
      %s22 = sphi 0, %s29
      %s23 = sphi 0, %s21
      %s24 = sphi 0, %s22
      %s25 = sphi 0, %s23
      %s26 = sphi 0, %s24
      %s38 = sphi 0, %s40
      %s41 = sphi 0, %s38
      %s42 = sphi 0, %s41
      %s58 = sphi 0, %s42
      %s64 = sphi 0, %s66
      %s67 = sphi 0, %s64
      %s68 = sphi 0, %s67
      %s84 = sphi 0, %s68
      %s92 = sphi 0, %s94
      %s95 = sphi 0, %s92
      %s96 = sphi 0, %s95
      %s112 = sphi 0, %s96
    $region4: #{tpu_custom_call.1} parent=1 // loop_header_branch
      %17 = sbr.rel (%p15) target = $region8
    $region5: #{tpu_custom_call.1} parent=1 // loop_body
      %s19 = ssub.s32 %s14, 1
      %s20 = ssub.s32 %s14, 2
      %s27 = sadd.s32 1, %s22
      %p28 = scmp.ge.s32.totalorder %s27, 4
      %s29 = scalar_select %p28, 0, %s27
      %s30 = sadd.s32 1, %s21
      %s31 = scalar_select %p28, %s30, %s21
      %p32 = scmp.ge.s32.totalorder %s31, 1
      %s33 = scalar_select %p32, 0, %s31
      %s34 = ssub.s32 %s22, %s29
      %s35 = ssub.s32 %s21, %s33
      %s36 = sor.u32 %s34, %s35
      %p37 = scmp.eq.s32.totalorder %s36, 0
      %s39 = sadd.s32 %s38, 1
      %s40 = scalar_select %p37, %s38, %s39
      %p43 = pneg %p37
      %p44 = scmp.eq.s32.totalorder %s14, 3
      %p45 = por %p43, %p44
      %p46 = scmp.ne.s32.totalorder %s38, %s41
      %p47 = scmp.eq.s32.totalorder %s14, 0
      %p48 = por %p46, %p47
      %p49 = scmp.ne.s32.totalorder %s38, %s41
      %p50 = scmp.eq.s32.totalorder %s19, 3
      %p51 = por %p49, %p50
      %p52 = scmp.ne.s32.totalorder %s41, %s42
      %p53 = scmp.eq.s32.totalorder %s19, 0
      %p54 = por %p52, %p53
      %p55 = scmp.ne.s32.totalorder %s41, %s42
      %p56 = scmp.eq.s32.totalorder %s20, 3
      %p57 = por %p55, %p56
      %p59 = scmp.ne.s32.totalorder %s42, %s58
      %p60 = scmp.eq.s32.totalorder %s20, 0
      %p61 = por %p59, %p60
      %s62 = ssub.s32 %s21, %s33
      %p63 = scmp.eq.s32.totalorder %s62, 0
      %s65 = sadd.s32 %s64, 1
      %s66 = scalar_select %p63, %s64, %s65
      %p69 = pneg %p63
      %p70 = scmp.eq.s32.totalorder %s14, 3
      %p71 = por %p69, %p70
      %p72 = scmp.ne.s32.totalorder %s64, %s67
      %p73 = scmp.eq.s32.totalorder %s14, 0
      %p74 = por %p72, %p73
      %p75 = scmp.ne.s32.totalorder %s64, %s67
      %p76 = scmp.eq.s32.totalorder %s19, 3
      %p77 = por %p75, %p76
      %p78 = scmp.ne.s32.totalorder %s67, %s68
      %p79 = scmp.eq.s32.totalorder %s19, 0
      %p80 = por %p78, %p79
      %p81 = scmp.ne.s32.totalorder %s67, %s68
      %p82 = scmp.eq.s32.totalorder %s20, 3
      %p83 = por %p81, %p82
      %p85 = scmp.ne.s32.totalorder %s68, %s84
      %p86 = scmp.eq.s32.totalorder %s20, 0
      %p87 = por %p85, %p86
      %s88 = ssub.s32 %s22, %s29
      %s89 = ssub.s32 %s21, %s33
      %s90 = sor.u32 %s88, %s89
      %p91 = scmp.eq.s32.totalorder %s90, 0
      %s93 = sadd.s32 %s92, 1
      %s94 = scalar_select %p91, %s92, %s93
      %p97 = pneg %p91
      %p98 = scmp.eq.s32.totalorder %s14, 3
      %p99 = por %p97, %p98
      %p100 = scmp.ne.s32.totalorder %s92, %s95
      %p101 = scmp.eq.s32.totalorder %s14, 0
      %p102 = por %p100, %p101
      %p103 = scmp.ne.s32.totalorder %s92, %s95
      %p104 = scmp.eq.s32.totalorder %s19, 3
      %p105 = por %p103, %p104
      %p106 = scmp.ne.s32.totalorder %s95, %s96
      %p107 = scmp.eq.s32.totalorder %s19, 0
      %p108 = por %p106, %p107
      %p109 = scmp.ne.s32.totalorder %s95, %s96
      %p110 = scmp.eq.s32.totalorder %s20, 3
      %p111 = por %p109, %p110
      %p113 = scmp.ne.s32.totalorder %s96, %s112
      %p114 = scmp.eq.s32.totalorder %s20, 0
      %p115 = por %p113, %p114
      %p116 = scmp.le.s32.totalorder 1, %s14
      %p117 = scmp.lt.s32.totalorder %s14, 5
      %p118 = pnand %p116, %p117
      %p119 = pneg %p118
      // Predicated region
      $region9: #{tpu_custom_call.1} parent=5 // pred_check
        _
      $region10: #{tpu_custom_call.1} parent=5 // pred_check_branch
        %121 = sbr.rel (%p118) target = $region12
      $region11: #{tpu_custom_call.1} parent=5 // pred_region
        %s122 = ssub.s32 %s14, 1
        // Predicated region
        $region13: #{tpu_custom_call.1} parent=11 // pred_check
          %p123 = pneg %p80
        $region14: #{tpu_custom_call.1} parent=11 // pred_check_branch
          %125 = sbr.rel (%p123) target = $region16
        $region15: #{tpu_custom_call.1} parent=11 // pred_region
          %s126 = smul.u32 37, %s23
          %s127 = ssub.s32 38, %s126
          %p128 = scmp.lt.s32.totalorder %s127, 37
          %s129 = scalar_select %p128, %s127, 37
          %s130 = smul.u32 128, %s129
          %p131 = scmp.lt.s32.totalorder %s126, 37
          %s132 = scalar_select %p131, %s126, 37
          %s133 = smul.addr %s132, 8
          %s134 = scalar_lea.vmem %s1, %s133
          %s135 = smul.u32 37, %s23
          %s136 = ssub.s32 38, %s135
          %p137 = scmp.lt.s32.totalorder %s136, 37
          %s138 = scalar_select %p137, %s136, 37
          %s139 = smul.u32 128, %s138
        $region16: #{tpu_custom_call.1} parent=11 // pred_fallthru
          _
      $region12: #{tpu_custom_call.1} parent=5 // pred_fallthru
        _
      %p140 = scmp.lt.s32.totalorder %s14, 4
      // Predicated region
      $region17: #{tpu_custom_call.1} parent=5 // pred_check
        %p141 = pneg %p140
      $region18: #{tpu_custom_call.1} parent=5 // pred_check_branch
        %143 = sbr.rel (%p141) target = $region20
      $region19: #{tpu_custom_call.1} parent=5 // pred_region
        // Predicated region
        $region21: #{tpu_custom_call.1} parent=19 // pred_check
          %p144 = pneg %p48
        $region22: #{tpu_custom_call.1} parent=19 // pred_check_branch
          %146 = sbr.rel (%p144) target = $region24
        $region23: #{tpu_custom_call.1} parent=19 // pred_region
          %s147 = sand.u32 %s38, 1
          %s148 = scalar_lea.sflag [#allocation3], %s147
          %s149 = sand.u32 %s38, 1
          %s150 = smul.addr %s149, 296
          %s151 = scalar_lea.vmem [#allocation2], %s150
          %s152 = smul.u32 37, %s21
          %s154 = ssub.s32 4736, 4736
          %155 = vsyncadd %s148, %s154
          %s156 = smul.addr %s22, 37
          %s157 = sadd.s32 %s152, %s156
          %s158 = smul.addr %s157, 128
          %s159 = scalar_lea.hbm %s0, %s158
          %s160 = sshll.u32 %s151, 4
          %s161 = int_to_ptr.vmem [resolvable:$true] %s160
          %166 = dma.hbm_to_vmem [thread:$0]  %s159, 4736, %s161, %s148, 128, 128, 8
        $region24: #{tpu_custom_call.1} parent=19 // pred_fallthru
          _
      $region20: #{tpu_custom_call.1} parent=5 // pred_fallthru
        _
      %p167 = scmp.le.s32.totalorder 1, %s14
      %p168 = scmp.lt.s32.totalorder %s14, 5
      %p169 = pnand %p167, %p168
      %p170 = pneg %p169
      // Predicated region
      $region25: #{tpu_custom_call.1} parent=5 // pred_check
        _
      $region26: #{tpu_custom_call.1} parent=5 // pred_check_branch
        %172 = sbr.rel (%p169) target = $region28
      $region27: #{tpu_custom_call.1} parent=5 // pred_region
        %s173 = ssub.s32 %s14, 1
        %s174 = sand.u32 %s41, 1
        %s175 = scalar_lea.sflag [#allocation3], %s174
        %s176 = sand.u32 %s41, 1
        %s177 = smul.addr %s176, 296
        %s178 = scalar_lea.vmem [#allocation2], %s177
        // Predicated region
        $region29: #{tpu_custom_call.1} parent=27 // pred_check
          %p179 = pneg %p54
        $region30: #{tpu_custom_call.1} parent=27 // pred_check_branch
          %181 = sbr.rel (%p179) target = $region32
        $region31: #{tpu_custom_call.1} parent=27 // pred_region
          %182 = dma.done %s175, 4736
        $region32: #{tpu_custom_call.1} parent=27 // pred_fallthru
          _
        %s183 = sand.u32 %s41, 1
        %s184 = scalar_lea.sflag [#allocation3], %s183
        %s185 = sand.u32 %s41, 1
        %s186 = smul.addr %s185, 296
        %s187 = scalar_lea.vmem [#allocation2], %s186
        %p188 = pneg %p54
        %p189 = pneg %p51
        %s190 = smul.u32 37, %s23
        %s191 = ssub.s32 38, %s190
        %p192 = scmp.lt.s32.totalorder %s191, 37
        %s193 = scalar_select %p192, %s191, 37
        %s194 = smul.u32 128, %s193
        %p195 = scmp.lt.s32.totalorder %s190, 37
        %s196 = scalar_select %p195, %s190, 37
        %s197 = smul.addr %s196, 8
        %s198 = scalar_lea.vmem %s1, %s197
        %p199 = pneg %p80
        %p200 = pneg %p77
        %p201 = pneg %p108
        %p202 = pneg %p105
        %s203 = sand.u32 %s95, 1
        %s204 = scalar_lea.sflag [#allocation4], %s203
        %s205 = sand.u32 %s95, 1
        %s206 = smul.addr %s205, 296
        %s207 = scalar_lea.vmem [#allocation5], %s206
        %s208 = smul.u32 37, %s23
        %s209 = smul.u32 37, %s23
        %s210 = ssub.s32 38, %s209
        %p211 = scmp.lt.s32.totalorder %s210, 37
        %s212 = scalar_select %p211, %s210, 37
        %s213 = smul.u32 128, %s212
        %p214 = scmp.lt.s32.totalorder %s209, 37
        %s215 = scalar_select %p214, %s209, 37
        %s216 = smul.addr %s215, 8
        %s217 = scalar_lea.vmem %s1, %s216
        %s218 = smul.u32 37, %s23
        %s219 = ssub.s32 38, %s218
        %p220 = scmp.lt.s32.totalorder %s219, 37
        %s221 = scalar_select %p220, %s219, 37
        %s222 = smul.u32 128, %s221
        %s223 = smul.u32 37, %s23
        %v224 = vld [vmem:[%s178] sm:$0xff]
        %v225 = vld [vmem:[%s178 + $0x8] sm:$0xff]
        %v226 = vld [vmem:[%s178 + $0x10] sm:$0xff]
        %v227 = vld [vmem:[%s178 + $0x18] sm:$0xff]
        %v228 = vld [vmem:[%s178 + $0x20] sm:$0xff]
        %v229 = vld [vmem:[%s178 + $0x28] sm:$0xff]
        %v230 = vld [vmem:[%s178 + $0x30] sm:$0xff]
        %v231 = vld [vmem:[%s178 + $0x38] sm:$0xff]
        %v232 = vld [vmem:[%s178 + $0x40] sm:$0xff]
        %v233 = vld [vmem:[%s178 + $0x48] sm:$0xff]
        %v234 = vld [vmem:[%s178 + $0x50] sm:$0xff]
        %v235 = vld [vmem:[%s178 + $0x58] sm:$0xff]
        %v236 = vld [vmem:[%s178 + $0x60] sm:$0xff]
        %v237 = vld [vmem:[%s178 + $0x68] sm:$0xff]
        %v238 = vld [vmem:[%s178 + $0x70] sm:$0xff]
        %v239 = vld [vmem:[%s178 + $0x78] sm:$0xff]
        %v240 = vld [vmem:[%s178 + $0x80] sm:$0xff]
        %v241 = vld [vmem:[%s178 + $0x88] sm:$0xff]
        %v242 = vld [vmem:[%s178 + $0x90] sm:$0xff]
        %v243 = vld [vmem:[%s178 + $0x98] sm:$0xff]
        %v244 = vld [vmem:[%s178 + $0xa0] sm:$0xff]
        %v245 = vld [vmem:[%s178 + $0xa8] sm:$0xff]
        %v246 = vld [vmem:[%s178 + $0xb0] sm:$0xff]
        %v247 = vld [vmem:[%s178 + $0xb8] sm:$0xff]
        %v248 = vld [vmem:[%s178 + $0xc0] sm:$0xff]
        %v249 = vld [vmem:[%s178 + $0xc8] sm:$0xff]
        %v250 = vld [vmem:[%s178 + $0xd0] sm:$0xff]
        %v251 = vld [vmem:[%s178 + $0xd8] sm:$0xff]
        %v252 = vld [vmem:[%s178 + $0xe0] sm:$0xff]
        %v253 = vld [vmem:[%s178 + $0xe8] sm:$0xff]
        %v254 = vld [vmem:[%s178 + $0xf0] sm:$0xff]
        %v255 = vld [vmem:[%s178 + $0xf8] sm:$0xff]
        %v256 = vld [vmem:[%s178 + $0x100] sm:$0xff]
        %v257 = vld [vmem:[%s178 + $0x108] sm:$0xff]
        %v258 = vld [vmem:[%s178 + $0x110] sm:$0xff]
        %v259 = vld [vmem:[%s178 + $0x118] sm:$0xff]
        %v260 = vld [vmem:[%s178 + $0x120] sm:$0xff]
        %v261 = vld [vmem:[%s217] sm:$0xff]
        %v262 = vld [vmem:[%s217 + $0x8] sm:$0xff]
        %v263 = vld [vmem:[%s217 + $0x10] sm:$0xff]
        %v264 = vld [vmem:[%s217 + $0x18] sm:$0xff]
        %v265 = vld [vmem:[%s217 + $0x20] sm:$0xff]
        %v266 = vld [vmem:[%s217 + $0x28] sm:$0xff]
        %v267 = vld [vmem:[%s217 + $0x30] sm:$0xff]
        %v268 = vld [vmem:[%s217 + $0x38] sm:$0xff]
        %v269 = vld [vmem:[%s217 + $0x40] sm:$0xff]
        %v270 = vld [vmem:[%s217 + $0x48] sm:$0xff]
        %v271 = vld [vmem:[%s217 + $0x50] sm:$0xff]
        %v272 = vld [vmem:[%s217 + $0x58] sm:$0xff]
        %v273 = vld [vmem:[%s217 + $0x60] sm:$0xff]
        %v274 = vld [vmem:[%s217 + $0x68] sm:$0xff]
        %v275 = vld [vmem:[%s217 + $0x70] sm:$0xff]
        %v276 = vld [vmem:[%s217 + $0x78] sm:$0xff]
        %v277 = vld [vmem:[%s217 + $0x80] sm:$0xff]
        %v278 = vld [vmem:[%s217 + $0x88] sm:$0xff]
        %v279 = vld [vmem:[%s217 + $0x90] sm:$0xff]
        %v280 = vld [vmem:[%s217 + $0x98] sm:$0xff]
        %v281 = vld [vmem:[%s217 + $0xa0] sm:$0xff]
        %v282 = vld [vmem:[%s217 + $0xa8] sm:$0xff]
        %v283 = vld [vmem:[%s217 + $0xb0] sm:$0xff]
        %v284 = vld [vmem:[%s217 + $0xb8] sm:$0xff]
        %v285 = vld [vmem:[%s217 + $0xc0] sm:$0xff]
        %v286 = vld [vmem:[%s217 + $0xc8] sm:$0xff]
        %v287 = vld [vmem:[%s217 + $0xd0] sm:$0xff]
        %v288 = vld [vmem:[%s217 + $0xd8] sm:$0xff]
        %v289 = vld [vmem:[%s217 + $0xe0] sm:$0xff]
        %v290 = vld [vmem:[%s217 + $0xe8] sm:$0xff]
        %v291 = vld [vmem:[%s217 + $0xf0] sm:$0xff]
        %v292 = vld [vmem:[%s217 + $0xf8] sm:$0xff]
        %v293 = vld [vmem:[%s217 + $0x100] sm:$0xff]
        %v294 = vld [vmem:[%s217 + $0x108] sm:$0xff]
        %v295 = vld [vmem:[%s217 + $0x110] sm:$0xff]
        %v296 = vld [vmem:[%s217 + $0x118] sm:$0xff]
        %v297 = vld [vmem:[%s217 + $0x120] sm:$0xff]
        %v298 = vadd.f32 %v224, %v261
        %v299 = vadd.f32 %v225, %v262
        %v300 = vadd.f32 %v226, %v263
        %v301 = vadd.f32 %v227, %v264
        %v302 = vadd.f32 %v228, %v265
        %v303 = vadd.f32 %v229, %v266
        %v304 = vadd.f32 %v230, %v267
        %v305 = vadd.f32 %v231, %v268
        %v306 = vadd.f32 %v232, %v269
        %v307 = vadd.f32 %v233, %v270
        %v308 = vadd.f32 %v234, %v271
        %v309 = vadd.f32 %v235, %v272
        %v310 = vadd.f32 %v236, %v273
        %v311 = vadd.f32 %v237, %v274
        %v312 = vadd.f32 %v238, %v275
        %v313 = vadd.f32 %v239, %v276
        %v314 = vadd.f32 %v240, %v277
        %v315 = vadd.f32 %v241, %v278
        %v316 = vadd.f32 %v242, %v279
        %v317 = vadd.f32 %v243, %v280
        %v318 = vadd.f32 %v244, %v281
        %v319 = vadd.f32 %v245, %v282
        %v320 = vadd.f32 %v246, %v283
        %v321 = vadd.f32 %v247, %v284
        %v322 = vadd.f32 %v248, %v285
        %v323 = vadd.f32 %v249, %v286
        %v324 = vadd.f32 %v250, %v287
        %v325 = vadd.f32 %v251, %v288
        %v326 = vadd.f32 %v252, %v289
        %v327 = vadd.f32 %v253, %v290
        %v328 = vadd.f32 %v254, %v291
        %v329 = vadd.f32 %v255, %v292
        %v330 = vadd.f32 %v256, %v293
        %v331 = vadd.f32 %v257, %v294
        %v332 = vadd.f32 %v258, %v295
        %v333 = vadd.f32 %v259, %v296
        %v334 = vadd.f32 %v260, %v297
        %335 = vst [vmem:[%s207] sm:$0xff] %v298
        %336 = vst [vmem:[%s207 + $0x8] sm:$0xff] %v299
        %337 = vst [vmem:[%s207 + $0x10] sm:$0xff] %v300
        %338 = vst [vmem:[%s207 + $0x18] sm:$0xff] %v301
        %339 = vst [vmem:[%s207 + $0x20] sm:$0xff] %v302
        %340 = vst [vmem:[%s207 + $0x28] sm:$0xff] %v303
        %341 = vst [vmem:[%s207 + $0x30] sm:$0xff] %v304
        %342 = vst [vmem:[%s207 + $0x38] sm:$0xff] %v305
        %343 = vst [vmem:[%s207 + $0x40] sm:$0xff] %v306
        %344 = vst [vmem:[%s207 + $0x48] sm:$0xff] %v307
        %345 = vst [vmem:[%s207 + $0x50] sm:$0xff] %v308
        %346 = vst [vmem:[%s207 + $0x58] sm:$0xff] %v309
        %347 = vst [vmem:[%s207 + $0x60] sm:$0xff] %v310
        %348 = vst [vmem:[%s207 + $0x68] sm:$0xff] %v311
        %349 = vst [vmem:[%s207 + $0x70] sm:$0xff] %v312
        %350 = vst [vmem:[%s207 + $0x78] sm:$0xff] %v313
        %351 = vst [vmem:[%s207 + $0x80] sm:$0xff] %v314
        %352 = vst [vmem:[%s207 + $0x88] sm:$0xff] %v315
        %353 = vst [vmem:[%s207 + $0x90] sm:$0xff] %v316
        %354 = vst [vmem:[%s207 + $0x98] sm:$0xff] %v317
        %355 = vst [vmem:[%s207 + $0xa0] sm:$0xff] %v318
        %356 = vst [vmem:[%s207 + $0xa8] sm:$0xff] %v319
        %357 = vst [vmem:[%s207 + $0xb0] sm:$0xff] %v320
        %358 = vst [vmem:[%s207 + $0xb8] sm:$0xff] %v321
        %359 = vst [vmem:[%s207 + $0xc0] sm:$0xff] %v322
        %360 = vst [vmem:[%s207 + $0xc8] sm:$0xff] %v323
        %361 = vst [vmem:[%s207 + $0xd0] sm:$0xff] %v324
        %362 = vst [vmem:[%s207 + $0xd8] sm:$0xff] %v325
        %363 = vst [vmem:[%s207 + $0xe0] sm:$0xff] %v326
        %364 = vst [vmem:[%s207 + $0xe8] sm:$0xff] %v327
        %365 = vst [vmem:[%s207 + $0xf0] sm:$0xff] %v328
        %366 = vst [vmem:[%s207 + $0xf8] sm:$0xff] %v329
        %367 = vst [vmem:[%s207 + $0x100] sm:$0xff] %v330
        %368 = vst [vmem:[%s207 + $0x108] sm:$0xff] %v331
        %369 = vst [vmem:[%s207 + $0x110] sm:$0xff] %v332
        %370 = vst [vmem:[%s207 + $0x118] sm:$0xff] %v333
        %371 = vst [vmem:[%s207 + $0x120] sm:$0xff] %v334
        %s372 = sand.u32 %s95, 1
        %s373 = scalar_lea.sflag [#allocation4], %s372
        %s374 = sand.u32 %s95, 1
        %s375 = smul.addr %s374, 296
        %s376 = scalar_lea.vmem [#allocation5], %s375
        // Predicated region
        $region33: #{tpu_custom_call.1} parent=27 // pred_check
          %p377 = pneg %p105
        $region34: #{tpu_custom_call.1} parent=27 // pred_check_branch
          %379 = sbr.rel (%p377) target = $region36
        $region35: #{tpu_custom_call.1} parent=27 // pred_region
          %s380 = smul.u32 37, %s23
          %s382 = ssub.s32 4736, 4736
          %383 = vsyncadd %s373, %s382
          %s384 = smul.addr %s24, 37
          %s385 = sadd.s32 %s380, %s384
          %s386 = smul.addr %s385, 128
          %s387 = scalar_lea.hbm %s2, %s386
          %s388 = sshll.u32 %s376, 4
          %s389 = int_to_ptr.vmem [resolvable:$true] %s388
          %394 = dma.vmem_to_hbm [thread:$0]  %s389, 4736, %s387, %s373, 128, 128, 8
        $region36: #{tpu_custom_call.1} parent=27 // pred_fallthru
          _
      $region28: #{tpu_custom_call.1} parent=5 // pred_fallthru
        _
      %p395 = scmp.le.s32.totalorder 2, %s14
      // Predicated region
      $region37: #{tpu_custom_call.1} parent=5 // pred_check
        %p396 = pneg %p395
      $region38: #{tpu_custom_call.1} parent=5 // pred_check_branch
        %398 = sbr.rel (%p396) target = $region40
      $region39: #{tpu_custom_call.1} parent=5 // pred_region
        %s399 = ssub.s32 %s14, 2
        // Predicated region
        $region41: #{tpu_custom_call.1} parent=39 // pred_check
          %p400 = pneg %p111
        $region42: #{tpu_custom_call.1} parent=39 // pred_check_branch
          %402 = sbr.rel (%p400) target = $region44
        $region43: #{tpu_custom_call.1} parent=39 // pred_region
          %s403 = sand.u32 %s96, 1
          %s404 = scalar_lea.sflag [#allocation4], %s403
          %s405 = sand.u32 %s96, 1
          %s406 = smul.addr %s405, 296
          %s407 = scalar_lea.vmem [#allocation5], %s406
          %408 = dma.done %s404, 4736
        $region44: #{tpu_custom_call.1} parent=39 // pred_fallthru
          _
      $region40: #{tpu_custom_call.1} parent=5 // pred_fallthru
        _
    $region6: #{tpu_custom_call.1} parent=1 // loop_footer
      %s18 = sadd.s32 1, %s14
    $region7: #{tpu_custom_call.1} parent=1 // loop_footer_branch
      %13 = sbr.rel target = $region3
    $region8: #{tpu_custom_call.1} parent=1 // loop_exit
      _
    %409 = vsyncpa [#allocation3], 1
    %s410 = scalar_lea.sflag [#allocation3], 1
    %411 = vsyncpa %s410, 1
    %412 = vsyncpa [#allocation4], 1
    %s413 = scalar_lea.sflag [#allocation4], 1
    %414 = vsyncpa %s413, 1

</llo_original>
